<compile_context>
chip_gen: v5e
topology: v5e:2x2
jax: 0.10.0
libtpu: 0.0.40
codegen_flags: <defaults>
</compile_context>

<pallas_src>
import functools

import jax
import jax.numpy as jnp
from jax.experimental import pallas as pl
from jax.experimental.pallas import tpu as pltpu


def _cin_kernel(g1_ref, beta_ref, x_ref, o_ref, *, eps):
    # g1_ref, beta_ref: (TC, 1)      x_ref / o_ref: (TN, TC, HW)
    x = x_ref[...].astype(jnp.float32)
    mean = jnp.mean(x, axis=-1, keepdims=True)                    # (TN, TC, 1)
    centered = x - mean
    var = jnp.mean(centered * centered, axis=-1, keepdims=True)   # biased variance
    inv_std = jax.lax.rsqrt(var + eps)                            # EUP rsqrt

    # Per-(n, c) scale / shift, computed once before the spatial write pass.
    scale = g1_ref[...][None, :, :] * inv_std                     # (TN, TC, 1)
    shift = beta_ref[...][None, :, :] - scale * mean              # (TN, TC, 1)

    # One FMA per element: out = scale * x + shift.
    o_ref[...] = (x * scale + shift).astype(o_ref.dtype)


def _choose_tiles(N, C, HW, itemsize, target_bytes):
    """Pick (TN, TC) so one (TN, TC, HW) block is ~target_bytes.

    TC must be a multiple of 8 or equal to C (sublane constraint of the BlockSpec);
    HW is always kept whole (it is the reduction axis and maps to the lane axis).
    """
    row_bytes = HW * itemsize
    if C * row_bytes <= target_bytes:
        tc = C
    else:
        tc = max(8, (target_bytes // row_bytes) // 8 * 8)
        tc = min(tc, C)
    block_bytes = tc * row_bytes
    tn = max(1, min(N, target_bytes // max(block_bytes, 1)))
    return int(tn), int(tc)


def conditional_instance_norm(x, latent, weight, bias, *, eps=1e-5,
                              target_block_bytes=2 * 1024 * 1024):
    """x: (N, C, H, W); latent: (latent_dim,); weight: (latent_dim, 2C); bias: (2C,)."""
    N, C, H, W = x.shape
    HW = H * W

    # Loop-invariant style projection, hoisted out of the kernel (tiny XLA matmul).
    # NOTE: the module applies a single latent vector's style to every batch element.
    style = latent.astype(jnp.float32) @ weight.astype(jnp.float32) \
        + bias.astype(jnp.float32)                                 # (2C,)
    g1 = (1.0 + style[:C]).reshape(C, 1)                           # (1 + gamma), (C, 1)
    beta = style[C:].reshape(C, 1)                                 # (C, 1)

    x_flat = x.reshape(N, C, HW)
    tn, tc = _choose_tiles(N, C, HW, x.dtype.itemsize, target_block_bytes)
    grid = (pl.cdiv(N, tn), pl.cdiv(C, tc))

    out_flat = pl.pallas_call(
        functools.partial(_cin_kernel, eps=eps),
        out_shape=jax.ShapeDtypeStruct((N, C, HW), x.dtype),
        grid=grid,
        in_specs=[
            pl.BlockSpec((tc, 1), lambda nb, cb: (cb, 0)),            # 1 + gamma
            pl.BlockSpec((tc, 1), lambda nb, cb: (cb, 0)),            # beta
            pl.BlockSpec((tn, tc, HW), lambda nb, cb: (nb, cb, 0)),   # x tile
        ],
        out_specs=pl.BlockSpec((tn, tc, HW), lambda nb, cb: (nb, cb, 0)),
        compiler_params=pltpu.CompilerParams(
            dimension_semantics=("parallel", "parallel"),
            vmem_limit_bytes=32 * 1024 * 1024,
        ),
    )(g1, beta, x_flat)

    return out_flat.reshape(N, C, H, W)


def _reference(x, latent, weight, bias, eps=1e-5):
    """Pure-JAX reference mirroring the PyTorch forward."""
    N, C, H, W = x.shape
    style = latent @ weight + bias                # (2C,)
    gamma = style[:C].reshape(1, C, 1, 1)
    beta = style[C:].reshape(1, C, 1, 1)
    mean = jnp.mean(x, axis=(2, 3), keepdims=True)
    var = jnp.mean((x - mean) ** 2, axis=(2, 3), keepdims=True)
    norm = (x - mean) / jnp.sqrt(var + eps)
    return (1.0 + gamma) * norm + beta


if __name__ == "__main__":
    N, C, H, W = 2, 4, 16, 16
    latent_dim = 64

    key = jax.random.PRNGKey(0)
    k_x, k_lat, k_w = jax.random.split(key, 3)

    x = jax.random.normal(k_x, (N, C, H, W), dtype=jnp.float32)
    latent = jax.random.normal(k_lat, (latent_dim,), dtype=jnp.float32)

    # nn.Linear(latent_dim, 2C): weight (2C, latent_dim); stored here transposed
    # as (latent_dim, 2C) so the projection is latent @ W.  The module's __init__
    # explicitly zeros the whole bias.
    w_torch_layout = jax.random.normal(k_w, (2 * C, latent_dim), dtype=jnp.float32) * 0.1
    weight = w_torch_layout.T                       # (latent_dim, 2C)
    bias = jnp.zeros((2 * C,), dtype=jnp.float32)   # bias.data[:C]=0, bias.data[C:]=0

    out = conditional_instance_norm(x, latent, weight, bias)
    out = jax.block_until_ready(out)

    ref = _reference(x, latent, weight, bias)
    assert out.shape == (N, C, H, W)
    assert jnp.allclose(out, ref, atol=1e-5, rtol=1e-5), "mismatch vs reference"

    print("KERNEL_OK")
</pallas_src>

<mosaic_0001>
module attributes {stable_mosaic.version = 11 : i64} {
  func.func @_cin_kernel(%arg0: i32, %arg1: i32, %arg2: memref<4x1xf32, #tpu.memory_space<vmem>>, %arg3: memref<4x1xf32, #tpu.memory_space<vmem>>, %arg4: memref<2x4x256xf32, #tpu.memory_space<vmem>>, %arg5: memref<2x4x256xf32, #tpu.memory_space<vmem>>) attributes {dimension_semantics = [#tpu.dimension_semantics<parallel>, #tpu.dimension_semantics<parallel>], iteration_bounds = array<i64: 1, 1>, scalar_prefetch = 0 : i64, scratch_operands = 0 : i64, tpu.core_type = #tpu.core_type<tc>, window_params = [{transform_indices = @transform_0, window_bounds = array<i64: 4, 1>}, {transform_indices = @transform_1, window_bounds = array<i64: 4, 1>}, {transform_indices = @transform_2, window_bounds = array<i64: 2, 4, 256>}, {transform_indices = @transform_3, window_bounds = array<i64: 2, 4, 256>}]} {
    %c0 = arith.constant 0 : index
    %c0_0 = arith.constant 0 : index
    %c0_1 = arith.constant 0 : index
    %0 = vector.load %arg4[%c0, %c0_0, %c0_1] : memref<2x4x256xf32, #tpu.memory_space<vmem>>, vector<2x4x256xf32>
    %cst = arith.constant dense<0.000000e+00> : vector<2x4xf32>
    %1 = vector.multi_reduction <add>, %0, %cst [2] : vector<2x4x256xf32> to vector<2x4xf32>
    %2 = vector.shape_cast %1 : vector<2x4xf32> to vector<2x4x1xf32>
    %cst_2 = arith.constant 2.560000e+02 : f32
    %3 = vector.broadcast %cst_2 : f32 to vector<2x4x1xf32>
    %4 = arith.divf %2, %3 : vector<2x4x1xf32>
    %5 = vector.broadcast %4 : vector<2x4x1xf32> to vector<2x4x256xf32>
    %6 = arith.subf %0, %5 : vector<2x4x256xf32>
    %7 = arith.mulf %6, %6 : vector<2x4x256xf32>
    %cst_3 = arith.constant dense<0.000000e+00> : vector<2x4xf32>
    %8 = vector.multi_reduction <add>, %7, %cst_3 [2] : vector<2x4x256xf32> to vector<2x4xf32>
    %9 = vector.shape_cast %8 : vector<2x4xf32> to vector<2x4x1xf32>
    %cst_4 = arith.constant 2.560000e+02 : f32
    %10 = vector.broadcast %cst_4 : f32 to vector<2x4x1xf32>
    %11 = arith.divf %9, %10 : vector<2x4x1xf32>
    %cst_5 = arith.constant 9.99999974E-6 : f32
    %12 = vector.broadcast %cst_5 : f32 to vector<2x4x1xf32>
    %13 = arith.addf %11, %12 : vector<2x4x1xf32>
    %14 = math.rsqrt %13 : vector<2x4x1xf32>
    %c0_6 = arith.constant 0 : index
    %c0_7 = arith.constant 0 : index
    %15 = vector.load %arg2[%c0_6, %c0_7] : memref<4x1xf32, #tpu.memory_space<vmem>>, vector<4x1xf32>
    %16 = vector.shape_cast %15 : vector<4x1xf32> to vector<1x4x1xf32>
    %17 = vector.broadcast %16 : vector<1x4x1xf32> to vector<2x4x1xf32>
    %18 = arith.mulf %17, %14 : vector<2x4x1xf32>
    %c0_8 = arith.constant 0 : index
    %c0_9 = arith.constant 0 : index
    %19 = vector.load %arg3[%c0_8, %c0_9] : memref<4x1xf32, #tpu.memory_space<vmem>>, vector<4x1xf32>
    %20 = vector.shape_cast %19 : vector<4x1xf32> to vector<1x4x1xf32>
    %21 = arith.mulf %18, %4 : vector<2x4x1xf32>
    %22 = vector.broadcast %20 : vector<1x4x1xf32> to vector<2x4x1xf32>
    %23 = arith.subf %22, %21 : vector<2x4x1xf32>
    %24 = vector.broadcast %18 : vector<2x4x1xf32> to vector<2x4x256xf32>
    %25 = arith.mulf %0, %24 : vector<2x4x256xf32>
    %26 = vector.broadcast %23 : vector<2x4x1xf32> to vector<2x4x256xf32>
    %27 = arith.addf %25, %26 : vector<2x4x256xf32>
    %c0_10 = arith.constant 0 : index
    %c0_11 = arith.constant 0 : index
    %c0_12 = arith.constant 0 : index
    %28 = vector.load %arg5[%c0_10, %c0_11, %c0_12] : memref<2x4x256xf32, #tpu.memory_space<vmem>>, vector<2x4x256xf32>
    tpu.vector_store %arg5[%c0_10, %c0_11, %c0_12], %27 {strides = array<i32>} : memref<2x4x256xf32, #tpu.memory_space<vmem>>, vector<2x4x256xf32>,
    return
  }
  func.func @transform_0(%arg0: i32, %arg1: i32) -> (i32, i32) {
    %c0_i32 = arith.constant 0 : i32
    %c0_i32_0 = arith.constant 0 : i32
    return %arg1, %c0_i32 : i32, i32
  }
  func.func @transform_1(%arg0: i32, %arg1: i32) -> (i32, i32) {
    %c0_i32 = arith.constant 0 : i32
    %c0_i32_0 = arith.constant 0 : i32
    return %arg1, %c0_i32 : i32, i32
  }
  func.func @transform_2(%arg0: i32, %arg1: i32) -> (i32, i32, i32) {
    %c0_i32 = arith.constant 0 : i32
    %c0_i32_0 = arith.constant 0 : i32
    return %arg0, %arg1, %c0_i32 : i32, i32, i32
  }
  func.func @transform_3(%arg0: i32, %arg1: i32) -> (i32, i32, i32) {
    %c0_i32 = arith.constant 0 : i32
    %c0_i32_0 = arith.constant 0 : i32
    return %arg0, %arg1, %c0_i32 : i32, i32, i32
  }
}

</mosaic_0001>

<llo_original>
// kernel: tpu_custom_call.1
$region0: #{tpu_custom_call.1}
  #allocation0 [shape = 'u32[]', space=smem, size = 0x4, offset = 0x4, fixed_abs, tag = 'smem constant byte address 0x4 - core index']
  #allocation1 [shape = 'u32[72,128]{1,0:T(1,128)}', space=vmem, size = 0x9000, scoped, tag = 'internal scratch']
  %s0 = inlined_call_operand.vmem [shape: f32[4,1], index: 0, kind: input, shape index: {}]
  %s1 = inlined_call_operand.vmem [shape: f32[4,1], index: 1, kind: input, shape index: {}]
  %s2 = inlined_call_operand.hbm [shape: f32[2,4,256], index: 2, kind: input, shape index: {}]
  %s3 = inlined_call_operand.hbm [shape: f32[2,4,256], index: 3, kind: output, shape index: {}]
  %s4 = sld [smem:[#allocation0]]
  $region26: #{tpu_custom_call.1} parent=0
    _
  %s6 = ssub.s32 1, %s4
  %s7 = scalar_select 0, %s6, %s4
  $region1: #{tpu_custom_call.1} parent=0
    #allocation2 [shape = 'u8[8192]{0}', space=vmem, size = 0x2000, scoped, tag = 'input window, operand 2, single buffered']
    #allocation3 [shape = 's32[1]{0}', space=sflag, size = 0x4, scoped, tag = 'scoped memory for tpu_custom_call.1']
    #allocation4 [shape = 's32[1]{0}', space=sflag, size = 0x4, scoped, tag = 'scoped memory for tpu_custom_call.1']
    #allocation5 [shape = 'u8[8192]{0}', space=vmem, size = 0x2000, scoped, tag = 'output window, operand 0, single buffered']
    %8 = vsyncpa [#allocation3], 0
    %9 = vsyncpa [#allocation4], 0
    // Predicated region
    $region2: #{tpu_custom_call.1} parent=1 // pred_check
      _
    $region3: #{tpu_custom_call.1} parent=1 // pred_check_branch
      %11 = sbr.rel (0) target = $region5
    $region4: #{tpu_custom_call.1} parent=1 // pred_region
      _
    $region5: #{tpu_custom_call.1} parent=1 // pred_fallthru
      _
    // Predicated region
    $region6: #{tpu_custom_call.1} parent=1 // pred_check
      _
    $region7: #{tpu_custom_call.1} parent=1 // pred_check_branch
      %13 = sbr.rel (0) target = $region9
    $region8: #{tpu_custom_call.1} parent=1 // pred_region
      _
    $region9: #{tpu_custom_call.1} parent=1 // pred_fallthru
      _
    // Predicated region
    $region10: #{tpu_custom_call.1} parent=1 // pred_check
      _
    $region11: #{tpu_custom_call.1} parent=1 // pred_check_branch
      %15 = sbr.rel (0) target = $region13
    $region12: #{tpu_custom_call.1} parent=1 // pred_region
      %17 = vsyncadd [#allocation3], 0
      %s18 = sshll.u32 %s2, 4
      %s19 = int_to_ptr.hbm [resolvable:$true] %s18
      %s20 = sshll.u32 [#allocation2], 4
      %s21 = int_to_ptr.vmem [resolvable:$true] %s20
      %26 = dma.hbm_to_vmem [thread:$0]  %s19, 256, %s21, [#allocation3], 128, 128, 8
    $region13: #{tpu_custom_call.1} parent=1 // pred_fallthru
      _
    // Predicated region
    $region14: #{tpu_custom_call.1} parent=1 // pred_check
      _
    $region15: #{tpu_custom_call.1} parent=1 // pred_check_branch
      %28 = sbr.rel (0) target = $region17
    $region16: #{tpu_custom_call.1} parent=1 // pred_region
      %30 = dma.done [#allocation3], 256
    $region17: #{tpu_custom_call.1} parent=1 // pred_fallthru
      _
    %v31 = vld [vmem:[#allocation2] sm:$0xff]
    %v32 = vld [vmem:[#allocation2 + $0x8] sm:$0xff]
    %35 = vst [vmem:[#allocation1] ss:$2 sm:$0xff] %v31
    %v36 = vld.sshfl [vmem:[#allocation1] sm:$0xff pattern:$0x75316420]
    %v37 = vld.sshfl [vmem:[#allocation1 + $0x8] sm:$0xff pattern:$0x75316420]
    %s38 = scalar_lea.vmem [#allocation1], 16
    %39 = vst [vmem:[%s38] ss:$2 sm:$0xff] %v32
    %v40 = vld.sshfl [vmem:[#allocation1 + $0x10] sm:$0xff pattern:$0x75316420]
    %v41 = vld.sshfl [vmem:[#allocation1 + $0x18] sm:$0xff pattern:$0x75316420]
    %vm46 = vcmask 1043456
    %v47 = vsel %vm46, %v36, 0.0
    %v48 = vsel %vm46, %v37, 0.0
    %v49 = vadd.f32 %v47, %v48
    %50 = vadd.xlane.f32.xlu0 %v49
    %v51 = vpop.xlane.xlu0 %50
    %v52 = vsel %vm46, %v40, 0.0
    %v53 = vsel %vm46, %v41, 0.0
    %v54 = vadd.f32 %v52, %v53
    %55 = vadd.xlane.f32.xlu0 %v54
    %v56 = vpop.xlane.xlu0 %55
    %v57 = vrcp.pop 256.0
    %v58 = vmul.f32 256.0, %v57
    %v59 = vsub.f32 1.0, %v58
    %v60 = vmul.f32 %v57, %v59
    %v61 = vadd.f32 %v57, %v60
    %vm62 = vweird.f32 %v57
    %v63 = vsel %vm62, %v57, %v61
    %v64 = vmul.f32 %v51, %v63
    %v65 = vmul.f32 %v56, %v63
    %v69 = vunpack.c.l.s4 839922192
    %v70 = vunpack.c.0.s8 %v69
    %v71 = vperm.slane %v64, %v70
    %v73 = vunpack.c.l.s4 839922192
    %v74 = vunpack.c.0.s8 %v73
    %v75 = vperm.slane %v65, %v74
    %v78 = vsub.f32 %v31, %v71
    %v79 = vsub.f32 %v32, %v75
    %v80 = vmul.f32 %v78, %v78
    %v81 = vmul.f32 %v79, %v79
    %84 = vst [vmem:[#allocation1] ss:$2 sm:$0xff] %v80
    %v85 = vld.sshfl [vmem:[#allocation1] sm:$0xff pattern:$0x75316420]
    %v86 = vld.sshfl [vmem:[#allocation1 + $0x8] sm:$0xff pattern:$0x75316420]
    %s87 = scalar_lea.vmem [#allocation1], 16
    %88 = vst [vmem:[%s87] ss:$2 sm:$0xff] %v81
    %v89 = vld.sshfl [vmem:[#allocation1 + $0x10] sm:$0xff pattern:$0x75316420]
    %v90 = vld.sshfl [vmem:[#allocation1 + $0x18] sm:$0xff pattern:$0x75316420]
    %v95 = vsel %vm46, %v85, 0.0
    %v96 = vsel %vm46, %v86, 0.0
    %v97 = vadd.f32 %v95, %v96
    %98 = vadd.xlane.f32.xlu0 %v97
    %v99 = vpop.xlane.xlu0 %98
    %v100 = vsel %vm46, %v89, 0.0
    %v101 = vsel %vm46, %v90, 0.0
    %v102 = vadd.f32 %v100, %v101
    %103 = vadd.xlane.f32.xlu0 %v102
    %v104 = vpop.xlane.xlu0 %103
    %v105 = vmul.f32 %v99, %v63
    %v106 = vmul.f32 %v104, %v63
    %v107 = vadd.f32 %v105, 1e-05
    %v108 = vadd.f32 %v106, 1e-05
    %v109 = vrsqrt.pop %v107
    %v110 = vmul.f32 %v109, %v107
    %v111 = vmul.f32 %v110, %v109
    %v112 = vmul.f32 0.5, %v111
    %v113 = vsub.f32 1.5, %v112
    %v114 = vmul.f32 %v109, %v113
    %vm115 = vweird.f32 %v107
    %vm116 = vweird.f32 %v109
    %vm117 = vmor %vm115, %vm116
    %v118 = vsel %vm117, %v109, %v114
    %v119 = vrsqrt.pop %v108
    %v120 = vmul.f32 %v119, %v108
    %v121 = vmul.f32 %v120, %v119
    %v122 = vmul.f32 0.5, %v121
    %v123 = vsub.f32 1.5, %v122
    %v124 = vmul.f32 %v119, %v123
    %vm125 = vweird.f32 %v108
    %vm126 = vweird.f32 %v119
    %vm127 = vmor %vm125, %vm126
    %v128 = vsel %vm127, %v119, %v124
    %v129 = vld [vmem:[%s0] sm:$0xf]
    %v130 = vmul.f32 %v129, %v118
    %v131 = vmul.f32 %v129, %v128
    %v132 = vld [vmem:[%s1] sm:$0xf]
    %v133 = vmul.f32 %v130, %v64
    %v134 = vmul.f32 %v131, %v65
    %v135 = vsub.f32 %v132, %v133
    %v136 = vsub.f32 %v132, %v134
    %138 = vset.pattern.permute.xlu0 0
    %139 = vperm.xlu0 %138, %v130
    %v140 = vpop.permute.xlu0 %139
    %142 = vset.pattern.permute.xlu0 0
    %143 = vperm.xlu0 %142, %v131
    %v144 = vpop.permute.xlu0 %143
    %v146 = vunpack.c.l.s4 839922192
    %v147 = vunpack.c.0.s8 %v146
    %v148 = vperm.slane %v140, %v147
    %v150 = vunpack.c.l.s4 839922192
    %v151 = vunpack.c.0.s8 %v150
    %v152 = vperm.slane %v144, %v151
    %v155 = vmul.f32 %v31, %v148
    %v156 = vmul.f32 %v32, %v152
    %158 = vset.pattern.permute.xlu0 0
    %159 = vperm.xlu0 %158, %v135
    %v160 = vpop.permute.xlu0 %159
    %162 = vset.pattern.permute.xlu0 0
    %163 = vperm.xlu0 %162, %v136
    %v164 = vpop.permute.xlu0 %163
    %v166 = vunpack.c.l.s4 839922192
    %v167 = vunpack.c.0.s8 %v166
    %v168 = vperm.slane %v160, %v167
    %v170 = vunpack.c.l.s4 839922192
    %v171 = vunpack.c.0.s8 %v170
    %v172 = vperm.slane %v164, %v171
    %v175 = vadd.f32 %v155, %v168
    %v176 = vadd.f32 %v156, %v172
    %177 = vst [vmem:[#allocation5] sm:$0xff] %v175
    %178 = vst [vmem:[#allocation5 + $0x8] sm:$0xff] %v176
    // Predicated region
    $region18: #{tpu_custom_call.1} parent=1 // pred_check
      _
    $region19: #{tpu_custom_call.1} parent=1 // pred_check_branch
      %180 = sbr.rel (0) target = $region21
    $region20: #{tpu_custom_call.1} parent=1 // pred_region
      %182 = vsyncadd [#allocation4], 0
      %s183 = sshll.u32 [#allocation5], 4
      %s184 = int_to_ptr.vmem [resolvable:$true] %s183
      %s185 = sshll.u32 %s3, 4
      %s186 = int_to_ptr.hbm [resolvable:$true] %s185
      %191 = dma.vmem_to_hbm [thread:$0]  %s184, 256, %s186, [#allocation4], 128, 128, 8
    $region21: #{tpu_custom_call.1} parent=1 // pred_fallthru
      _
    // Predicated region
    $region22: #{tpu_custom_call.1} parent=1 // pred_check
      _
    $region23: #{tpu_custom_call.1} parent=1 // pred_check_branch
      %193 = sbr.rel (0) target = $region25
    $region24: #{tpu_custom_call.1} parent=1 // pred_region
      %195 = dma.done [#allocation4], 256
    $region25: #{tpu_custom_call.1} parent=1 // pred_fallthru
      _
    %196 = vsyncpa [#allocation3], 1
    %197 = vsyncpa [#allocation4], 1

</llo_original>
